<compile_context>
chip_gen: v6e
topology: v6e:2x2x1
jax: 0.10.0
libtpu: 0.0.40
codegen_flags: <defaults>
</compile_context>

<pallas_src>
import functools

import jax
import jax.numpy as jnp
from jax.experimental import pallas as pl
from jax.experimental.pallas import tpu as pltpu

IN_DIM = 768
HID_DIM = 128
OUT_DIM = 6
PAD_CLS = 8            # classes padded 6 -> 8 (one sublane group)
NEG_INF = -1e30        # bias for padded class rows -> exp() underflows to 0


def _round_up(x, m):
    return ((x + m - 1) // m) * m


def _classifier_kernel(x_ref, w1_ref, b1_ref, w2t_ref, b2t_ref, o_ref):
    # In-kernel cast of the streaming operand (VALU has slack); avoids a separate
    # full-HBM-pass cast op in the wrapper.
    x = x_ref[...].astype(w1_ref.dtype)                        # (TB, 768)

    # fc1 on the MXU with f32 accumulation, then bias + ReLU.
    h = jnp.dot(x, w1_ref[...], preferred_element_type=jnp.float32)
    h = jnp.maximum(h + b1_ref[...], 0.0)                      # (TB, 128) f32

    # fc2 computed transposed: (8 classes, TB batch). w2t is (8, 128) with zero-padded
    # class rows; contraction over the hidden dim rides the MXU, any relayout of h
    # rides the XLU (free slots in a mem-bound kernel).
    logits_t = jnp.einsum("ch,bh->cb", w2t_ref[...], h,
                          preferred_element_type=jnp.float32)  # (8, TB)
    logits_t = logits_t + b2t_ref[...]                         # padded rows -> -1e30

    # softmax over classes (sublane axis); padded class rows underflow to 0.
    m = jnp.max(logits_t, axis=0, keepdims=True)
    e = jnp.exp(logits_t - m)
    denom = jnp.sum(e, axis=0, keepdims=True)
    o_ref[...] = (e * pl.reciprocal(denom, approx=True)).astype(o_ref.dtype)


@functools.partial(jax.jit, static_argnames=("block_b", "use_bf16"))
def linear_classifier(x, w1, b1, w2, b2, *, block_b=2048, use_bf16=True):
    """x: (B, 768) -> (B, 6) softmax probabilities.

    w1: (768, 128), b1: (128,), w2: (128, 6), b2: (6,)  (weights stored transposed
    relative to torch so the kernel computes x @ W directly).
    """
    B = x.shape[0]

    # Batch tile selection (no wrapper-side padding copy of x):
    #  * B <= 128: single full-extent tile (any B allowed by the full-dim exception).
    #  * B  > 128: at least 2 tiles so the "parallel" grid axis can shard across the
    #    two v7x TensorCores; tb is a multiple of 128 so output blocks stay lane-dense.
    if B <= 128:
        tb = B
    else:
        tb = min(block_b, _round_up(pl.cdiv(B, 2), 128))
    grid = (pl.cdiv(B, tb),)

    if use_bf16:
        w1 = w1.astype(jnp.bfloat16)      # tiny one-time cast; x cast happens in-kernel
    else:
        w1 = w1.astype(jnp.float32)

    b1 = b1.reshape(1, HID_DIM).astype(jnp.float32)
    # fc2 stored transposed and class-padded: (8, 128) weights, (8, 1) bias.
    w2t = jnp.zeros((PAD_CLS, HID_DIM), jnp.float32).at[:OUT_DIM, :].set(
        w2.T.astype(jnp.float32))
    b2t = jnp.full((PAD_CLS, 1), NEG_INF, jnp.float32).at[:OUT_DIM, 0].set(
        b2.astype(jnp.float32))

    cost = pl.CostEstimate(
        flops=2 * B * IN_DIM * HID_DIM + 2 * B * HID_DIM * PAD_CLS,
        transcendentals=B * PAD_CLS,
        bytes_accessed=(B * IN_DIM * x.dtype.itemsize
                        + IN_DIM * HID_DIM * w1.dtype.itemsize
                        + (HID_DIM + PAD_CLS * HID_DIM + PAD_CLS) * 4
                        + PAD_CLS * B * 4),
    )

    out_t = pl.pallas_call(
        _classifier_kernel,
        out_shape=jax.ShapeDtypeStruct((PAD_CLS, B), jnp.float32),
        grid_spec=pltpu.PrefetchScalarGridSpec(
            num_scalar_prefetch=0,
            grid=grid,
            in_specs=[
                pl.BlockSpec((tb, IN_DIM), lambda i: (i, 0)),        # x streams over batch
                pl.BlockSpec((IN_DIM, HID_DIM), lambda i: (0, 0)),   # w1: VMEM-resident
                pl.BlockSpec((1, HID_DIM), lambda i: (0, 0)),        # b1
                pl.BlockSpec((PAD_CLS, HID_DIM), lambda i: (0, 0)),  # w2^T (class-padded)
                pl.BlockSpec((PAD_CLS, 1), lambda i: (0, 0)),        # b2^T (class-padded)
            ],
            out_specs=pl.BlockSpec((PAD_CLS, tb), lambda i: (0, i)),
        ),
        compiler_params=pltpu.CompilerParams(
            dimension_semantics=("parallel",),
            vmem_limit_bytes=32 * 1024 * 1024),
        cost_estimate=cost,
    )(x, w1, b1, w2t, b2t)

    # (8, B) -> (B, 6): tiny slice + transpose (~56 B/row) vs the old 512 B/row pass.
    return out_t[:OUT_DIM, :].T


def init_params(key):
    """Deterministic init mimicking torch.nn.Linear (uniform +/- 1/sqrt(fan_in))."""
    k1, k2, k3, k4 = jax.random.split(key, 4)
    bound1 = 1.0 / jnp.sqrt(IN_DIM)
    bound2 = 1.0 / jnp.sqrt(HID_DIM)
    w1 = jax.random.uniform(k1, (IN_DIM, HID_DIM), jnp.float32, -bound1, bound1)
    b1 = jax.random.uniform(k2, (HID_DIM,), jnp.float32, -bound1, bound1)
    w2 = jax.random.uniform(k3, (HID_DIM, OUT_DIM), jnp.float32, -bound2, bound2)
    b2 = jax.random.uniform(k4, (OUT_DIM,), jnp.float32, -bound2, bound2)
    return w1, b1, w2, b2


def reference(x, w1, b1, w2, b2):
    h = jnp.maximum(x @ w1 + b1.reshape(1, -1), 0.0)
    logits = h @ w2 + b2.reshape(1, -1)
    return jax.nn.softmax(logits, axis=1)


if __name__ == "__main__":
    key = jax.random.PRNGKey(0)
    kx, kp = jax.random.split(key)
    w1, b1, w2, b2 = init_params(kp)

    # 8 / 20: single full-extent tile (grid=1); 300: ragged multi-tile grid (masked last block).
    for B in (8, 20, 300):
        x = jax.random.normal(jax.random.fold_in(kx, B), (B, IN_DIM), jnp.float32)
        out = linear_classifier(x, w1, b1, w2, b2)
        out = jax.block_until_ready(out)
        ref = reference(x, w1, b1, w2, b2)

        assert out.shape == (B, OUT_DIM), out.shape
        # bf16 fc1 + approx reciprocal -> compare with loosened tolerance.
        assert jnp.allclose(out, ref, atol=2e-2, rtol=2e-2), "mismatch vs JAX reference"
        # rows sum to ~1 (softmax check; approx reciprocal -> ~1e-3 relative error).
        assert jnp.allclose(jnp.sum(out, axis=1), jnp.ones((B,)), atol=1e-2)

    print("KERNEL_OK")
</pallas_src>

<mosaic_0001>
module attributes {stable_mosaic.version = 11 : i64} {
  func.func @_classifier_kernel(%arg0: i32, %arg1: memref<8x768xf32, #tpu.memory_space<vmem>>, %arg2: memref<768x128xbf16, #tpu.memory_space<vmem>>, %arg3: memref<1x128xf32, #tpu.memory_space<vmem>>, %arg4: memref<8x128xf32, #tpu.memory_space<vmem>>, %arg5: memref<8x1xf32, #tpu.memory_space<vmem>>, %arg6: memref<8x8xf32, #tpu.memory_space<vmem>>) attributes {dimension_semantics = [#tpu.dimension_semantics<parallel>], iteration_bounds = array<i64: 1>, scalar_prefetch = 0 : i64, scratch_operands = 0 : i64, tpu.core_type = #tpu.core_type<tc>, window_params = [{transform_indices = @transform_0, window_bounds = array<i64: 8, 768>}, {pipeline_mode = #tpu.pipeline_mode<synchronous>, transform_indices = @transform_1, window_bounds = array<i64: 768, 128>}, {pipeline_mode = #tpu.pipeline_mode<synchronous>, transform_indices = @transform_2, window_bounds = array<i64: 1, 128>}, {pipeline_mode = #tpu.pipeline_mode<synchronous>, transform_indices = @transform_3, window_bounds = array<i64: 8, 128>}, {pipeline_mode = #tpu.pipeline_mode<synchronous>, transform_indices = @transform_4, window_bounds = array<i64: 8, 1>}, {transform_indices = @transform_5, window_bounds = array<i64: 8, 8>}]} {
    %c0 = arith.constant 0 : index
    %c0_0 = arith.constant 0 : index
    %0 = vector.load %arg1[%c0, %c0_0] : memref<8x768xf32, #tpu.memory_space<vmem>>, vector<8x768xf32>
    %1 = arith.truncf %0 : vector<8x768xf32> to vector<8x768xbf16>
    %c0_1 = arith.constant 0 : index
    %c0_2 = arith.constant 0 : index
    %2 = vector.load %arg2[%c0_1, %c0_2] : memref<768x128xbf16, #tpu.memory_space<vmem>>, vector<768x128xbf16>
    %cst = arith.constant dense<0.000000e+00> : vector<8x128xf32>
    %3 = tpu.matmul %1, %2, %cst {dimension_numbers = #tpu.dot_dimension_numbers<[1], [0], [0], [1], [0, 0, 1, 1], [], []>} : vector<8x768xbf16>, vector<768x128xbf16>, vector<8x128xf32> -> vector<8x128xf32>
    %c0_3 = arith.constant 0 : index
    %c0_4 = arith.constant 0 : index
    %4 = vector.load %arg3[%c0_3, %c0_4] : memref<1x128xf32, #tpu.memory_space<vmem>>, vector<1x128xf32>
    %5 = vector.broadcast %4 : vector<1x128xf32> to vector<8x128xf32>
    %6 = arith.addf %3, %5 : vector<8x128xf32>
    %cst_5 = arith.constant 0.000000e+00 : f32
    %7 = vector.broadcast %cst_5 : f32 to vector<8x128xf32>
    %8 = arith.maximumf %6, %7 : vector<8x128xf32>
    %c0_6 = arith.constant 0 : index
    %c0_7 = arith.constant 0 : index
    %9 = vector.load %arg4[%c0_6, %c0_7] : memref<8x128xf32, #tpu.memory_space<vmem>>, vector<8x128xf32>
    "tpu.trace_start"() <{level = 10 : i32, message = "ch,bh->cb"}> : () -> ()
    %cst_8 = arith.constant dense<0.000000e+00> : vector<8x8xf32>
    %10 = tpu.matmul %9, %8, %cst_8 {dimension_numbers = #tpu.dot_dimension_numbers<[1], [1], [0], [0], [0, 0, 1, 0], [], []>} : vector<8x128xf32>, vector<8x128xf32>, vector<8x8xf32> -> vector<8x8xf32>
    "tpu.trace_stop"() : () -> ()
    %c0_9 = arith.constant 0 : index
    %c0_10 = arith.constant 0 : index
    %11 = vector.load %arg5[%c0_9, %c0_10] : memref<8x1xf32, #tpu.memory_space<vmem>>, vector<8x1xf32>
    %12 = vector.broadcast %11 : vector<8x1xf32> to vector<8x8xf32>
    %13 = arith.addf %10, %12 : vector<8x8xf32>
    %cst_11 = arith.constant dense<0xFF800000> : vector<8xf32>
    %14 = vector.multi_reduction <maximumf>, %13, %cst_11 [0] : vector<8x8xf32> to vector<8xf32>
    %15 = vector.shape_cast %14 : vector<8xf32> to vector<1x8xf32>
    %16 = vector.broadcast %15 : vector<1x8xf32> to vector<8x8xf32>
    %17 = arith.subf %13, %16 : vector<8x8xf32>
    %18 = math.exp %17 : vector<8x8xf32>
    %cst_12 = arith.constant dense<0.000000e+00> : vector<8xf32>
    %19 = vector.multi_reduction <add>, %18, %cst_12 [0] : vector<8x8xf32> to vector<8xf32>
    %20 = vector.shape_cast %19 : vector<8xf32> to vector<1x8xf32>
    %21 = tpu.reciprocal %20 {approx = true} : vector<1x8xf32> -> vector<1x8xf32>
    %22 = vector.broadcast %21 : vector<1x8xf32> to vector<8x8xf32>
    %23 = arith.mulf %18, %22 : vector<8x8xf32>
    %c0_13 = arith.constant 0 : index
    %c0_14 = arith.constant 0 : index
    %24 = vector.load %arg6[%c0_13, %c0_14] : memref<8x8xf32, #tpu.memory_space<vmem>>, vector<8x8xf32>
    tpu.vector_store %arg6[%c0_13, %c0_14], %23 {strides = array<i32>} : memref<8x8xf32, #tpu.memory_space<vmem>>, vector<8x8xf32>,
    return
  }
  func.func @transform_0(%arg0: i32) -> (i32, i32) {
    %c0_i32 = arith.constant 0 : i32
    %c0_i32_0 = arith.constant 0 : i32
    return %arg0, %c0_i32 : i32, i32
  }
  func.func @transform_1(%arg0: i32) -> (i32, i32) {
    %c0_i32 = arith.constant 0 : i32
    %c0_i32_0 = arith.constant 0 : i32
    %c0_i32_1 = arith.constant 0 : i32
    return %c0_i32, %c0_i32_0 : i32, i32
  }
  func.func @transform_2(%arg0: i32) -> (i32, i32) {
    %c0_i32 = arith.constant 0 : i32
    %c0_i32_0 = arith.constant 0 : i32
    %c0_i32_1 = arith.constant 0 : i32
    return %c0_i32, %c0_i32_0 : i32, i32
  }
  func.func @transform_3(%arg0: i32) -> (i32, i32) {
    %c0_i32 = arith.constant 0 : i32
    %c0_i32_0 = arith.constant 0 : i32
    %c0_i32_1 = arith.constant 0 : i32
    return %c0_i32, %c0_i32_0 : i32, i32
  }
  func.func @transform_4(%arg0: i32) -> (i32, i32) {
    %c0_i32 = arith.constant 0 : i32
    %c0_i32_0 = arith.constant 0 : i32
    %c0_i32_1 = arith.constant 0 : i32
    return %c0_i32, %c0_i32_0 : i32, i32
  }
  func.func @transform_5(%arg0: i32) -> (i32, i32) {
    %c0_i32 = arith.constant 0 : i32
    %c0_i32_0 = arith.constant 0 : i32
    return %c0_i32, %arg0 : i32, i32
  }
}

</mosaic_0001>

<llo_original>
// kernel: linear_classifier.1
$region0: #{linear_classifier.1}
  #allocation0 [shape = 'u32[]', space=smem, size = 0x4, offset = 0x4, fixed_abs, tag = 'smem constant byte address 0x4 - core index']
  #allocation1 [shape = 'u32[144,128]{1,0:T(1,128)}', space=vmem, size = 0x12000, scoped, tag = 'internal scratch']
  %s0 = inlined_call_operand.vmem [shape: f32[8,768], index: 0, kind: input, shape index: {}]
  %s1 = inlined_call_operand.vmem [shape: bf16[768,128], index: 1, kind: input, shape index: {}]
  %s2 = inlined_call_operand.vmem [shape: f32[1,128], index: 2, kind: input, shape index: {}]
  %s3 = inlined_call_operand.vmem [shape: f32[8,128], index: 3, kind: input, shape index: {}]
  %s4 = inlined_call_operand.vmem [shape: f32[8,1], index: 4, kind: input, shape index: {}]
  %s5 = inlined_call_operand.vmem [shape: f32[8,8], index: 5, kind: output, shape index: {}]
  %s6 = sld [smem:[#allocation0]]
  $region30: #{linear_classifier.1} parent=0
    _
  %s8 = ssub.s32 1, %s6
  %s9 = scalar_select 0, %s8, %s6
  // Predicated region
  $region2: #{linear_classifier.1} parent=0 // pred_check
    _
  $region3: #{linear_classifier.1} parent=0 // pred_check_branch
    %11 = sbr.rel (0) target = $region5
  $region4: #{linear_classifier.1} parent=0 // pred_region
    _
  $region5: #{linear_classifier.1} parent=0 // pred_fallthru
    _
  // Predicated region
  $region6: #{linear_classifier.1} parent=0 // pred_check
    _
  $region7: #{linear_classifier.1} parent=0 // pred_check_branch
    %13 = sbr.rel (0) target = $region9
  $region8: #{linear_classifier.1} parent=0 // pred_region
    _
  $region9: #{linear_classifier.1} parent=0 // pred_fallthru
    _
  // Predicated region
  $region10: #{linear_classifier.1} parent=0 // pred_check
    _
  $region11: #{linear_classifier.1} parent=0 // pred_check_branch
    %15 = sbr.rel (0) target = $region13
  $region12: #{linear_classifier.1} parent=0 // pred_region
    _
  $region13: #{linear_classifier.1} parent=0 // pred_fallthru
    _
  // Predicated region
  $region14: #{linear_classifier.1} parent=0 // pred_check
    _
  $region15: #{linear_classifier.1} parent=0 // pred_check_branch
    %17 = sbr.rel (0) target = $region17
  $region16: #{linear_classifier.1} parent=0 // pred_region
    _
  $region17: #{linear_classifier.1} parent=0 // pred_fallthru
    _
  // Predicated region
  $region18: #{linear_classifier.1} parent=0 // pred_check
    _
  $region19: #{linear_classifier.1} parent=0 // pred_check_branch
    %19 = sbr.rel (0) target = $region21
  $region20: #{linear_classifier.1} parent=0 // pred_region
    _
  $region21: #{linear_classifier.1} parent=0 // pred_fallthru
    _
  %v21 = vld [vmem:[%s0] sm:$0xff]
  %v22 = vld [vmem:[%s0 + $0x8] sm:$0xff]
  %v23 = vld [vmem:[%s0 + $0x10] sm:$0xff]
  %v24 = vld [vmem:[%s0 + $0x18] sm:$0xff]
  %v25 = vld [vmem:[%s0 + $0x20] sm:$0xff]
  %v26 = vld [vmem:[%s0 + $0x28] sm:$0xff]
  %v27 = vpack.c.bf16 %v21, %v21
  %v28 = vpack.c.bf16 %v22, %v22
  %v29 = vpack.c.bf16 %v23, %v23
  %v30 = vpack.c.bf16 %v24, %v24
  %v31 = vpack.c.bf16 %v25, %v25
  %v32 = vpack.c.bf16 %v26, %v26
  %v33 = vld [vmem:[%s1] sm:$0xf]
  %v34 = vld [vmem:[%s1 + $0x4] sm:$0xf]
  %v35 = vld [vmem:[%s1 + $0x8] sm:$0xf]
  %v36 = vld [vmem:[%s1 + $0xc] sm:$0xf]
  %v37 = vld [vmem:[%s1 + $0x10] sm:$0xf]
  %v38 = vld [vmem:[%s1 + $0x14] sm:$0xf]
  %v39 = vld [vmem:[%s1 + $0x18] sm:$0xf]
  %v40 = vld [vmem:[%s1 + $0x1c] sm:$0xf]
  %v41 = vld [vmem:[%s1 + $0x20] sm:$0xf]
  %v42 = vld [vmem:[%s1 + $0x24] sm:$0xf]
  %v43 = vld [vmem:[%s1 + $0x28] sm:$0xf]
  %v44 = vld [vmem:[%s1 + $0x2c] sm:$0xf]
  %v45 = vld [vmem:[%s1 + $0x30] sm:$0xf]
  %v46 = vld [vmem:[%s1 + $0x34] sm:$0xf]
  %v47 = vld [vmem:[%s1 + $0x38] sm:$0xf]
  %v48 = vld [vmem:[%s1 + $0x3c] sm:$0xf]
  %v49 = vld [vmem:[%s1 + $0x40] sm:$0xf]
  %v50 = vld [vmem:[%s1 + $0x44] sm:$0xf]
  %v51 = vld [vmem:[%s1 + $0x48] sm:$0xf]
  %v52 = vld [vmem:[%s1 + $0x4c] sm:$0xf]
  %v53 = vld [vmem:[%s1 + $0x50] sm:$0xf]
  %v54 = vld [vmem:[%s1 + $0x54] sm:$0xf]
  %v55 = vld [vmem:[%s1 + $0x58] sm:$0xf]
  %v56 = vld [vmem:[%s1 + $0x5c] sm:$0xf]
  %v57 = vld [vmem:[%s1 + $0x60] sm:$0xf]
  %v58 = vld [vmem:[%s1 + $0x64] sm:$0xf]
  %v59 = vld [vmem:[%s1 + $0x68] sm:$0xf]
  %v60 = vld [vmem:[%s1 + $0x6c] sm:$0xf]
  %v61 = vld [vmem:[%s1 + $0x70] sm:$0xf]
  %v62 = vld [vmem:[%s1 + $0x74] sm:$0xf]
  %v63 = vld [vmem:[%s1 + $0x78] sm:$0xf]
  %v64 = vld [vmem:[%s1 + $0x7c] sm:$0xf]
  %v65 = vld [vmem:[%s1 + $0x80] sm:$0xf]
  %v66 = vld [vmem:[%s1 + $0x84] sm:$0xf]
  %v67 = vld [vmem:[%s1 + $0x88] sm:$0xf]
  %v68 = vld [vmem:[%s1 + $0x8c] sm:$0xf]
  %v69 = vld [vmem:[%s1 + $0x90] sm:$0xf]
  %v70 = vld [vmem:[%s1 + $0x94] sm:$0xf]
  %v71 = vld [vmem:[%s1 + $0x98] sm:$0xf]
  %v72 = vld [vmem:[%s1 + $0x9c] sm:$0xf]
  %v73 = vld [vmem:[%s1 + $0xa0] sm:$0xf]
  %v74 = vld [vmem:[%s1 + $0xa4] sm:$0xf]
  %v75 = vld [vmem:[%s1 + $0xa8] sm:$0xf]
  %v76 = vld [vmem:[%s1 + $0xac] sm:$0xf]
  %v77 = vld [vmem:[%s1 + $0xb0] sm:$0xf]
  %v78 = vld [vmem:[%s1 + $0xb4] sm:$0xf]
  %v79 = vld [vmem:[%s1 + $0xb8] sm:$0xf]
  %v80 = vld [vmem:[%s1 + $0xbc] sm:$0xf]
  %v81 = vld [vmem:[%s1 + $0xc0] sm:$0xf]
  %v82 = vld [vmem:[%s1 + $0xc4] sm:$0xf]
  %v83 = vld [vmem:[%s1 + $0xc8] sm:$0xf]
  %v84 = vld [vmem:[%s1 + $0xcc] sm:$0xf]
  %v85 = vld [vmem:[%s1 + $0xd0] sm:$0xf]
  %v86 = vld [vmem:[%s1 + $0xd4] sm:$0xf]
  %v87 = vld [vmem:[%s1 + $0xd8] sm:$0xf]
  %v88 = vld [vmem:[%s1 + $0xdc] sm:$0xf]
  %v89 = vld [vmem:[%s1 + $0xe0] sm:$0xf]
  %v90 = vld [vmem:[%s1 + $0xe4] sm:$0xf]
  %v91 = vld [vmem:[%s1 + $0xe8] sm:$0xf]
  %v92 = vld [vmem:[%s1 + $0xec] sm:$0xf]
  %v93 = vld [vmem:[%s1 + $0xf0] sm:$0xf]
  %v94 = vld [vmem:[%s1 + $0xf4] sm:$0xf]
  %v95 = vld [vmem:[%s1 + $0xf8] sm:$0xf]
  %v96 = vld [vmem:[%s1 + $0xfc] sm:$0xf]
  %v97 = vld [vmem:[%s1 + $0x100] sm:$0xf]
  %v98 = vld [vmem:[%s1 + $0x104] sm:$0xf]
  %v99 = vld [vmem:[%s1 + $0x108] sm:$0xf]
  %v100 = vld [vmem:[%s1 + $0x10c] sm:$0xf]
  %v101 = vld [vmem:[%s1 + $0x110] sm:$0xf]
  %v102 = vld [vmem:[%s1 + $0x114] sm:$0xf]
  %v103 = vld [vmem:[%s1 + $0x118] sm:$0xf]
  %v104 = vld [vmem:[%s1 + $0x11c] sm:$0xf]
  %v105 = vld [vmem:[%s1 + $0x120] sm:$0xf]
  %v106 = vld [vmem:[%s1 + $0x124] sm:$0xf]
  %v107 = vld [vmem:[%s1 + $0x128] sm:$0xf]
  %v108 = vld [vmem:[%s1 + $0x12c] sm:$0xf]
  %v109 = vld [vmem:[%s1 + $0x130] sm:$0xf]
  %v110 = vld [vmem:[%s1 + $0x134] sm:$0xf]
  %v111 = vld [vmem:[%s1 + $0x138] sm:$0xf]
  %v112 = vld [vmem:[%s1 + $0x13c] sm:$0xf]
  %v113 = vld [vmem:[%s1 + $0x140] sm:$0xf]
  %v114 = vld [vmem:[%s1 + $0x144] sm:$0xf]
  %v115 = vld [vmem:[%s1 + $0x148] sm:$0xf]
  %v116 = vld [vmem:[%s1 + $0x14c] sm:$0xf]
  %v117 = vld [vmem:[%s1 + $0x150] sm:$0xf]
  %v118 = vld [vmem:[%s1 + $0x154] sm:$0xf]
  %v119 = vld [vmem:[%s1 + $0x158] sm:$0xf]
  %v120 = vld [vmem:[%s1 + $0x15c] sm:$0xf]
  %v121 = vld [vmem:[%s1 + $0x160] sm:$0xf]
  %v122 = vld [vmem:[%s1 + $0x164] sm:$0xf]
  %v123 = vld [vmem:[%s1 + $0x168] sm:$0xf]
  %v124 = vld [vmem:[%s1 + $0x16c] sm:$0xf]
  %v125 = vld [vmem:[%s1 + $0x170] sm:$0xf]
  %v126 = vld [vmem:[%s1 + $0x174] sm:$0xf]
  %v127 = vld [vmem:[%s1 + $0x178] sm:$0xf]
  %v128 = vld [vmem:[%s1 + $0x17c] sm:$0xf]
  %v129 = vld [vmem:[%s2] sm:$0x1]
  %v131 = vlaneseq
  %v132 = vshrl.u32 %v131, 7
  %v133 = vsub.s32 0, %v132
  %v134 = vrot.slane %v129, %v133
  %v232 = vunpack.c.l.b16 %v33
  %v233 = vunpack.c.l.b16 %v34
  %v234 = vunpack.c.l.b16 %v35
  %v235 = vunpack.c.l.b16 %v36
  %v236 = vunpack.c.l.b16 %v37
  %v237 = vunpack.c.l.b16 %v38
  %v238 = vunpack.c.l.b16 %v39
  %v239 = vunpack.c.l.b16 %v40
  %v240 = vunpack.c.l.b16 %v41
  %v241 = vunpack.c.l.b16 %v42
  %v242 = vunpack.c.l.b16 %v43
  %v243 = vunpack.c.l.b16 %v44
  %v244 = vunpack.c.l.b16 %v45
  %v245 = vunpack.c.l.b16 %v46
  %v246 = vunpack.c.l.b16 %v47
  %v247 = vunpack.c.l.b16 %v48
  %v248 = vunpack.c.l.b16 %v49
  %v249 = vunpack.c.l.b16 %v50
  %v250 = vunpack.c.l.b16 %v51
  %v251 = vunpack.c.l.b16 %v52
  %v252 = vunpack.c.l.b16 %v53
  %v253 = vunpack.c.l.b16 %v54
  %v254 = vunpack.c.l.b16 %v55
  %v255 = vunpack.c.l.b16 %v56
  %v256 = vunpack.c.l.b16 %v57
  %v257 = vunpack.c.l.b16 %v58
  %v258 = vunpack.c.l.b16 %v59
  %v259 = vunpack.c.l.b16 %v60
  %v260 = vunpack.c.l.b16 %v61
  %v261 = vunpack.c.l.b16 %v62
  %v262 = vunpack.c.l.b16 %v63
  %v263 = vunpack.c.l.b16 %v64
  %v264 = vunpack.c.l.b16 %v65
  %v265 = vunpack.c.l.b16 %v66
  %v266 = vunpack.c.l.b16 %v67
  %v267 = vunpack.c.l.b16 %v68
  %v268 = vunpack.c.l.b16 %v69
  %v269 = vunpack.c.l.b16 %v70
  %v270 = vunpack.c.l.b16 %v71
  %v271 = vunpack.c.l.b16 %v72
  %v272 = vunpack.c.l.b16 %v73
  %v273 = vunpack.c.l.b16 %v74
  %v274 = vunpack.c.l.b16 %v75
  %v275 = vunpack.c.l.b16 %v76
  %v276 = vunpack.c.l.b16 %v77
  %v277 = vunpack.c.l.b16 %v78
  %v278 = vunpack.c.l.b16 %v79
  %v279 = vunpack.c.l.b16 %v80
  %v280 = vunpack.c.l.b16 %v81
  %v281 = vunpack.c.l.b16 %v82
  %v282 = vunpack.c.l.b16 %v83
  %v283 = vunpack.c.l.b16 %v84
  %v284 = vunpack.c.l.b16 %v85
  %v285 = vunpack.c.l.b16 %v86
  %v286 = vunpack.c.l.b16 %v87
  %v287 = vunpack.c.l.b16 %v88
  %v288 = vunpack.c.l.b16 %v89
  %v289 = vunpack.c.l.b16 %v90
  %v290 = vunpack.c.l.b16 %v91
  %v291 = vunpack.c.l.b16 %v92
  %v292 = vunpack.c.l.b16 %v93
  %v293 = vunpack.c.l.b16 %v94
  %v294 = vunpack.c.l.b16 %v95
  %v295 = vunpack.c.l.b16 %v96
  %v296 = vunpack.c.l.b16 %v97
  %v297 = vunpack.c.l.b16 %v98
  %v298 = vunpack.c.l.b16 %v99
  %v299 = vunpack.c.l.b16 %v100
  %v300 = vunpack.c.l.b16 %v101
  %v301 = vunpack.c.l.b16 %v102
  %v302 = vunpack.c.l.b16 %v103
  %v303 = vunpack.c.l.b16 %v104
  %v304 = vunpack.c.l.b16 %v105
  %v305 = vunpack.c.l.b16 %v106
  %v306 = vunpack.c.l.b16 %v107
  %v307 = vunpack.c.l.b16 %v108
  %v308 = vunpack.c.l.b16 %v109
  %v309 = vunpack.c.l.b16 %v110
  %v310 = vunpack.c.l.b16 %v111
  %v311 = vunpack.c.l.b16 %v112
  %v312 = vunpack.c.l.b16 %v113
  %v313 = vunpack.c.l.b16 %v114
  %v314 = vunpack.c.l.b16 %v115
  %v315 = vunpack.c.l.b16 %v116
  %v316 = vunpack.c.l.b16 %v117
  %v317 = vunpack.c.l.b16 %v118
  %v318 = vunpack.c.l.b16 %v119
  %v319 = vunpack.c.l.b16 %v120
  %v320 = vunpack.c.l.b16 %v121
  %v321 = vunpack.c.l.b16 %v122
  %v322 = vunpack.c.l.b16 %v123
  %v323 = vunpack.c.l.b16 %v124
  %v324 = vunpack.c.l.b16 %v125
  %v325 = vunpack.c.l.b16 %v126
  %v326 = vunpack.c.l.b16 %v127
  %v327 = vunpack.c.l.b16 %v128
  %v328 = vpack.c.b16 %v233, %v232
  %v329 = vpack.c.b16 %v235, %v234
  %v330 = vpack.c.b16 %v237, %v236
  %v331 = vpack.c.b16 %v239, %v238
  %v332 = vpack.c.b16 %v241, %v240
  %v333 = vpack.c.b16 %v243, %v242
  %v334 = vpack.c.b16 %v245, %v244
  %v335 = vpack.c.b16 %v247, %v246
  %v336 = vpack.c.b16 %v249, %v248
  %v337 = vpack.c.b16 %v251, %v250
  %v338 = vpack.c.b16 %v253, %v252
  %v339 = vpack.c.b16 %v255, %v254
  %v340 = vpack.c.b16 %v257, %v256
  %v341 = vpack.c.b16 %v259, %v258
  %v342 = vpack.c.b16 %v261, %v260
  %v343 = vpack.c.b16 %v263, %v262
  %v344 = vpack.c.b16 %v265, %v264
  %v345 = vpack.c.b16 %v267, %v266
  %v346 = vpack.c.b16 %v269, %v268
  %v347 = vpack.c.b16 %v271, %v270
  %v348 = vpack.c.b16 %v273, %v272
  %v349 = vpack.c.b16 %v275, %v274
  %v350 = vpack.c.b16 %v277, %v276
  %v351 = vpack.c.b16 %v279, %v278
  %v352 = vpack.c.b16 %v281, %v280
  %v353 = vpack.c.b16 %v283, %v282
  %v354 = vpack.c.b16 %v285, %v284
  %v355 = vpack.c.b16 %v287, %v286
  %v356 = vpack.c.b16 %v289, %v288
  %v357 = vpack.c.b16 %v291, %v290
  %v358 = vpack.c.b16 %v293, %v292
  %v359 = vpack.c.b16 %v295, %v294
  %v360 = vpack.c.b16 %v297, %v296
  %v361 = vpack.c.b16 %v299, %v298
  %v362 = vpack.c.b16 %v301, %v300
  %v363 = vpack.c.b16 %v303, %v302
  %v364 = vpack.c.b16 %v305, %v304
  %v365 = vpack.c.b16 %v307, %v306
  %v366 = vpack.c.b16 %v309, %v308
  %v367 = vpack.c.b16 %v311, %v310
  %v368 = vpack.c.b16 %v313, %v312
  %v369 = vpack.c.b16 %v315, %v314
  %v370 = vpack.c.b16 %v317, %v316
  %v371 = vpack.c.b16 %v319, %v318
  %v372 = vpack.c.b16 %v321, %v320
  %v373 = vpack.c.b16 %v323, %v322
  %v374 = vpack.c.b16 %v325, %v324
  %v375 = vpack.c.b16 %v327, %v326
  %424 = vmatprep.subr.bf16.mxu0 0
  %425 = vmatpush1.bf16.msra.mxu0 %v335
  %426 = vmatprep.subr.bf16.mxu0 0
  %427 = vmatpush1.bf16.msra.mxu0 %v334
  %428 = vmatprep.subr.bf16.mxu0 0
  %429 = vmatpush1.bf16.msra.mxu0 %v333
  %430 = vmatprep.subr.bf16.mxu0 0
  %431 = vmatpush1.bf16.msra.mxu0 %v332
  %432 = vmatprep.subr.bf16.mxu0 0
  %433 = vmatpush1.bf16.msra.mxu0 %v331
  %434 = vmatprep.subr.bf16.mxu0 0
  %435 = vmatpush1.bf16.msra.mxu0 %v330
  %436 = vmatprep.subr.bf16.mxu0 0
  %437 = vmatpush1.bf16.msra.mxu0 %v329
  %438 = vmatprep.subr.bf16.mxu0 0
  %439 = vmatpush1.bf16.msra.mxu0 %v328
  %440 = vmatprep.subr.bf16.mxu0 0
  %441 = vmatpush2.bf16.msra.mxu0 %v343
  %442 = vmatprep.subr.bf16.mxu0 0
  %443 = vmatpush2.bf16.msra.mxu0 %v342
  %444 = vmatprep.subr.bf16.mxu0 0
  %445 = vmatpush2.bf16.msra.mxu0 %v341
  %446 = vmatprep.subr.bf16.mxu0 0
  %447 = vmatpush2.bf16.msra.mxu0 %v340
  %448 = vmatprep.subr.bf16.mxu0 0
  %449 = vmatpush2.bf16.msra.mxu0 %v339
  %450 = vmatprep.subr.bf16.mxu0 0
  %451 = vmatpush2.bf16.msra.mxu0 %v338
  %452 = vmatprep.subr.bf16.mxu0 0
  %453 = vmatpush2.bf16.msra.mxu0 %v337
  %454 = vmatprep.subr.bf16.mxu0 0
  %455 = vmatpush2.bf16.msra.mxu0 %v336
  %456 = vmatprep.mubr.bf16.mxu0 %v28
  %457 = vmatmul.mubr.bf16.gmra.mxu0 %v27
  %v458 = vpop.f32.mrf.mxu0
  %v459 = vadd.f32 %v134, %v458
  %v460 = vpop.f32.mrf.mxu0
  %v461 = vpop.f32.mrf.mxu0
  %v462 = vpop.f32.mrf.mxu0
  %463 = vdwg.mxu0
  %464 = vmatprep.subr.bf16.mxu0 0
  %465 = vmatpush1.bf16.msra.mxu0 %v351
  %466 = vmatprep.subr.bf16.mxu0 0
  %467 = vmatpush1.bf16.msra.mxu0 %v350
  %468 = vmatprep.subr.bf16.mxu0 0
  %469 = vmatpush1.bf16.msra.mxu0 %v349
  %470 = vmatprep.subr.bf16.mxu0 0
  %471 = vmatpush1.bf16.msra.mxu0 %v348
  %472 = vmatprep.subr.bf16.mxu0 0
  %473 = vmatpush1.bf16.msra.mxu0 %v347
  %474 = vmatprep.subr.bf16.mxu0 0
  %475 = vmatpush1.bf16.msra.mxu0 %v346
  %476 = vmatprep.subr.bf16.mxu0 0
  %477 = vmatpush1.bf16.msra.mxu0 %v345
  %478 = vmatprep.subr.bf16.mxu0 0
  %479 = vmatpush1.bf16.msra.mxu0 %v344
  %480 = vmatprep.subr.bf16.mxu0 0
  %481 = vmatpush2.bf16.msra.mxu0 %v359
  %482 = vmatprep.subr.bf16.mxu0 0
  %483 = vmatpush2.bf16.msra.mxu0 %v358
  %484 = vmatprep.subr.bf16.mxu0 0
  %485 = vmatpush2.bf16.msra.mxu0 %v357
  %486 = vmatprep.subr.bf16.mxu0 0
  %487 = vmatpush2.bf16.msra.mxu0 %v356
  %488 = vmatprep.subr.bf16.mxu0 0
  %489 = vmatpush2.bf16.msra.mxu0 %v355
  %490 = vmatprep.subr.bf16.mxu0 0
  %491 = vmatpush2.bf16.msra.mxu0 %v354
  %492 = vmatprep.subr.bf16.mxu0 0
  %493 = vmatpush2.bf16.msra.mxu0 %v353
  %494 = vmatprep.subr.bf16.mxu0 0
  %495 = vmatpush2.bf16.msra.mxu0 %v352
  %496 = vmatprep.mubr.bf16.mxu0 %v30
  %497 = vmatmul.mubr.bf16.gmra.mxu0 %v29
  %v498 = vpop.f32.mrf.mxu0
  %v499 = vadd.f32 %v459, %v498
  %v500 = vpop.f32.mrf.mxu0
  %v501 = vpop.f32.mrf.mxu0
  %v502 = vpop.f32.mrf.mxu0
  %503 = vdwg.mxu0
  %504 = vmatprep.subr.bf16.mxu0 0
  %505 = vmatpush1.bf16.msra.mxu0 %v367
  %506 = vmatprep.subr.bf16.mxu0 0
  %507 = vmatpush1.bf16.msra.mxu0 %v366
  %508 = vmatprep.subr.bf16.mxu0 0
  %509 = vmatpush1.bf16.msra.mxu0 %v365
  %510 = vmatprep.subr.bf16.mxu0 0
  %511 = vmatpush1.bf16.msra.mxu0 %v364
  %512 = vmatprep.subr.bf16.mxu0 0
  %513 = vmatpush1.bf16.msra.mxu0 %v363
  %514 = vmatprep.subr.bf16.mxu0 0
  %515 = vmatpush1.bf16.msra.mxu0 %v362
  %516 = vmatprep.subr.bf16.mxu0 0
  %517 = vmatpush1.bf16.msra.mxu0 %v361
  %518 = vmatprep.subr.bf16.mxu0 0
  %519 = vmatpush1.bf16.msra.mxu0 %v360
  %520 = vmatprep.subr.bf16.mxu0 0
  %521 = vmatpush2.bf16.msra.mxu0 %v375
  %522 = vmatprep.subr.bf16.mxu0 0
  %523 = vmatpush2.bf16.msra.mxu0 %v374
  %524 = vmatprep.subr.bf16.mxu0 0
  %525 = vmatpush2.bf16.msra.mxu0 %v373
  %526 = vmatprep.subr.bf16.mxu0 0
  %527 = vmatpush2.bf16.msra.mxu0 %v372
  %528 = vmatprep.subr.bf16.mxu0 0
  %529 = vmatpush2.bf16.msra.mxu0 %v371
  %530 = vmatprep.subr.bf16.mxu0 0
  %531 = vmatpush2.bf16.msra.mxu0 %v370
  %532 = vmatprep.subr.bf16.mxu0 0
  %533 = vmatpush2.bf16.msra.mxu0 %v369
  %534 = vmatprep.subr.bf16.mxu0 0
  %535 = vmatpush2.bf16.msra.mxu0 %v368
  %536 = vmatprep.mubr.bf16.mxu0 %v32
  %537 = vmatmul.mubr.bf16.gmra.mxu0 %v31
  %v538 = vpop.f32.mrf.mxu0
  %v539 = vadd.f32 %v499, %v538
  %v540 = vpop.f32.mrf.mxu0
  %v541 = vpop.f32.mrf.mxu0
  %v542 = vpop.f32.mrf.mxu0
  %543 = vdwg.mxu0
  %v544 = vmax.f32 %v539, 0.0
  %v545 = vld [vmem:[%s3] sm:$0xff]
  %v546 = vld [vmem:[%s4] sm:$0xff]
  %548 = vset.pattern.permute.xlu0 0
  %549 = vperm.xlu0 %548, %v546
  %v550 = vpop.permute.xlu0 %549
  %552 = vmatprep.subr.mxu0 0.0
  %553 = vmatpush1.xpose.msra.mxu0 0.0
  %554 = vmatprep.subr.mxu0 0.0
  %555 = vmatpush1.xpose.msra.mxu0 0.0
  %556 = vmatprep.subr.mxu0 0.0
  %557 = vmatpush1.xpose.msra.mxu0 0.0
  %558 = vmatprep.subr.mxu0 0.0
  %559 = vmatpush1.xpose.msra.mxu0 0.0
  %560 = vmatprep.subr.mxu0 0.0
  %561 = vmatpush1.xpose.msra.mxu0 0.0
  %562 = vmatprep.subr.mxu0 0.0
  %563 = vmatpush1.xpose.msra.mxu0 0.0
  %564 = vmatprep.subr.mxu0 0.0
  %565 = vmatpush1.xpose.msra.mxu0 0.0
  %566 = vmatprep.subr.mxu0 0.0
  %567 = vmatpush1.xpose.msra.mxu0 0.0
  %568 = vmatprep.subr.mxu0 0.0
  %569 = vmatpush1.xpose.msra.mxu0 0.0
  %570 = vmatprep.subr.mxu0 0.0
  %571 = vmatpush1.xpose.msra.mxu0 0.0
  %572 = vmatprep.subr.mxu0 0.0
  %573 = vmatpush1.xpose.msra.mxu0 0.0
  %574 = vmatprep.subr.mxu0 0.0
  %575 = vmatpush1.xpose.msra.mxu0 0.0
  %576 = vmatprep.subr.mxu0 0.0
  %577 = vmatpush1.xpose.msra.mxu0 0.0
  %578 = vmatprep.subr.mxu0 0.0
  %579 = vmatpush1.xpose.msra.mxu0 0.0
  %580 = vmatprep.subr.mxu0 0.0
  %581 = vmatpush1.xpose.msra.mxu0 0.0
  %582 = vmatprep.subr.mxu0 0.0
  %583 = vmatpush1.xpose.msra.mxu0 %v544
  %584 = vmatprep.subr.mxu0 0.0
  %585 = vmatpush2.xpose.msra.mxu0 0.0
  %586 = vmatprep.subr.mxu0 0.0
  %587 = vmatpush2.xpose.msra.mxu0 0.0
  %588 = vmatprep.subr.mxu0 0.0
  %589 = vmatpush2.xpose.msra.mxu0 0.0
  %590 = vmatprep.subr.mxu0 0.0
  %591 = vmatpush2.xpose.msra.mxu0 0.0
  %592 = vmatprep.subr.mxu0 0.0
  %593 = vmatpush2.xpose.msra.mxu0 0.0
  %594 = vmatprep.subr.mxu0 0.0
  %595 = vmatpush2.xpose.msra.mxu0 0.0
  %596 = vmatprep.subr.mxu0 0.0
  %597 = vmatpush2.xpose.msra.mxu0 0.0
  %598 = vmatprep.subr.mxu0 0.0
  %599 = vmatpush2.xpose.msra.mxu0 0.0
  %600 = vmatprep.subr.mxu0 0.0
  %601 = vmatpush2.xpose.msra.mxu0 0.0
  %602 = vmatprep.subr.mxu0 0.0
  %603 = vmatpush2.xpose.msra.mxu0 0.0
  %604 = vmatprep.subr.mxu0 0.0
  %605 = vmatpush2.xpose.msra.mxu0 0.0
  %606 = vmatprep.subr.mxu0 0.0
  %607 = vmatpush2.xpose.msra.mxu0 0.0
  %608 = vmatprep.subr.mxu0 0.0
  %609 = vmatpush2.xpose.msra.mxu0 0.0
  %610 = vmatprep.subr.mxu0 0.0
  %611 = vmatpush2.xpose.msra.mxu0 0.0
  %612 = vmatprep.subr.mxu0 0.0
  %613 = vmatpush2.xpose.msra.mxu0 0.0
  %614 = vmatprep.subr.mxu0 0.0
  %615 = vmatpush2.xpose.msra.mxu0 0.0
  %616 = vmatprep.mubr.f32.mxu0 0.0
  %617 = vmatmul.mubr.f32.gmra.mxu0 %v545
  %v618 = vpop.f32.mrf.mxu0
  %v619 = vadd.f32 %v550, %v618
  %v620 = vpop.f32.mrf.mxu0
  %621 = vdwg.mxu0
  %vm622 = vcmask 64512
  %v623 = vsel %vm622, %v619, -inf
  %v624 = vrot.slane %v623, 4
  %v625 = vmax.f32 %v623, %v624
  %v626 = vrot.slane %v625, 2
  %v627 = vmax.f32 %v625, %v626
  %v628 = vrot.slane %v627, 1
  %v629 = vmax.f32 %v627, %v628
  %v630 = vsub.f32 %v619, %v629
  %v631 = vmul.f32 %v630, 1.442695
  %v632 = vpow.pop %v631
  %v633 = vsel %vm622, %v632, 0.0
  %v634 = vrot.slane %v633, 4
  %v635 = vadd.f32 %v633, %v634
  %v636 = vrot.slane %v635, 2
  %v637 = vadd.f32 %v635, %v636
  %v638 = vrot.slane %v637, 1
  %v639 = vadd.f32 %v637, %v638
  %v640 = vrcp.pop %v639
  %v641 = vmul.f32 %v632, %v640
  %642 = vst.msk [vmem:[%s5] sm:$0xff] %vm622, %v641
  // Predicated region
  $region22: #{linear_classifier.1} parent=0 // pred_check
    _
  $region23: #{linear_classifier.1} parent=0 // pred_check_branch
    %644 = sbr.rel (0) target = $region25
  $region24: #{linear_classifier.1} parent=0 // pred_region
    _
  $region25: #{linear_classifier.1} parent=0 // pred_fallthru
    _
  // Predicated region
  $region26: #{linear_classifier.1} parent=0 // pred_check
    _
  $region27: #{linear_classifier.1} parent=0 // pred_check_branch
    %646 = sbr.rel (0) target = $region29
  $region28: #{linear_classifier.1} parent=0 // pred_region
    _
  $region29: #{linear_classifier.1} parent=0 // pred_fallthru
    _

</llo_original>
